<compile_context>
chip_gen: v6e
topology: v6e:2x2x1
jax: 0.10.0
libtpu: 0.0.40
codegen_flags: <defaults>
</compile_context>

<pallas_src>
import functools
import math

import jax
import jax.numpy as jnp
from jax.experimental import pallas as pl
from jax.experimental.pallas import tpu as pltpu


def conv_bn_relu_kernel(x_ref, w_ref, mask_ref, b_ref, g_ref, be_ref, o_ref, patch_ref,
                        *, stride, kh, kw, wf_pad, s_pad, ho, wo, cin, group_size,
                        eps, apply_bias, apply_affine):
    # x_ref:     (N, Cin, Lflat)        flattened, padded NCHW input (mxu_dtype)
    # w_ref:     (Cout, Kdim_pad)       im2col-ordered weights (mxu_dtype)
    # mask_ref:  (1, N*Spad) f32        1.0 on valid output columns
    # b/g/be:    (Cout, 1) f32          conv-bias / BN gamma / BN beta
    # o_ref:     (N, Cout, Spad) f32
    # patch_ref: (Kdim_pad, N*Spad)     mxu_dtype VMEM im2col scratch
    n = x_ref.shape[0]
    n_taps = kh * kw
    rows_per_group = group_size * cin                      # multiple of 8 by construction
    n_groups = patch_ref.shape[0] // rows_per_group

    # ---- im2col staging: sublane-aligned tap groups, no channel padding, no casts ----
    for nb in range(n):                                    # N tiny & static -> unrolled
        lane0 = nb * s_pad                                 # multiple of 128 -> lane-dense
        for g in range(n_groups):
            parts = []
            for u in range(group_size):
                t = g * group_size + u
                if t < n_taps:
                    i, j = divmod(t, kw)
                    start = i * wf_pad + j
                    if stride == 1:
                        win = x_ref[nb, :, start:start + s_pad]          # (Cin, Spad)
                    else:
                        # TODO(synk): stride>1 path (strided lane load) is not exercised by
                        # the __main__ checks; validate on hardware before relying on it.
                        win = x_ref[nb, :, pl.ds(start, s_pad, stride=stride)]
                else:
                    win = jnp.zeros((cin, s_pad), x_ref.dtype)           # pad taps
                parts.append(win)
            block = parts[0] if group_size == 1 else jnp.concatenate(parts, axis=0)
            patch_ref[g * rows_per_group:(g + 1) * rows_per_group,
                      lane0:lane0 + s_pad] = block

    # ---- convolution: ONE MXU matmul over the whole batch (f32 accumulation) ----
    acc = jnp.dot(w_ref[...], patch_ref[...],
                  preferred_element_type=jnp.float32)      # (Cout, N*Spad) f32
    if apply_bias:
        # kept for fidelity when bias is not None (it cancels under train-mode BN)
        acc = acc + b_ref[...]

    # ---- BatchNorm2d (training mode: batch mean / biased variance per channel) ----
    # single masked pass: mean = E[a], var = E[a^2] - mean^2 (mask is {0,1} so am*acc = a^2*mask)
    mask = mask_ref[...]                                   # (1, N*Spad)
    am = acc * mask
    inv_cnt = 1.0 / float(n * ho * wo)
    mean = jnp.sum(am, axis=1, keepdims=True) * inv_cnt                      # (Cout, 1)
    var = jnp.sum(am * acc, axis=1, keepdims=True) * inv_cnt - mean * mean   # (Cout, 1)
    scale = jax.lax.rsqrt(var + eps)
    if apply_affine:
        scale = scale * g_ref[...]
        shift = be_ref[...] - mean * scale
    else:
        shift = -mean * scale

    # ---- normalize + ReLU + lane-dense per-image stores ----
    y = jnp.maximum(acc * scale + shift, 0.0).astype(o_ref.dtype)
    for nb in range(n):
        o_ref[nb] = y[:, nb * s_pad:(nb + 1) * s_pad]      # 128-aligned lane slice


def conv_bn_relu(x_nchw, w_oihw, bias, gamma, beta, *, stride, padding, eps=1e-5,
                 mxu_dtype=jnp.bfloat16):
    """Fused Conv2d + BatchNorm2d(train-mode batch stats) + ReLU.  NCHW in, NCHW out."""
    n, cin, h, w = x_nchw.shape
    cout, _, kh, kw = w_oihw.shape
    ho = (h + 2 * padding - kh) // stride + 1
    wo = (w + 2 * padding - kw) // stride + 1
    wf = w + 2 * padding                      # natural padded row pitch
    hp = h + 2 * padding

    # Lane-pad the flat row pitch so the per-image flat extent Spad = Ho*wf_pad is a
    # multiple of 128 (unmasked stores / reductions, 128-aligned per-image lane offsets).
    lane_quant = 128 // math.gcd(ho, 128)
    wf_pad = -(-wf // lane_quant) * lane_quant
    s_pad = ho * wf_pad

    # Tap grouping so every staging store is sublane aligned WITHOUT per-tap channel pad.
    group_size = 8 // math.gcd(cin, 8)
    n_taps = kh * kw
    n_groups = -(-n_taps // group_size)
    kdim = n_taps * cin
    kdim_pad = n_groups * group_size * cin    # 36 -> 40 here (was 72 with channel padding)

    # --- input: ONE fused zero pad (spatial pad, row-pitch pad to wf_pad, a few extra
    #     bottom rows so every flat tap window stays in bounds) + flatten H,W. No transposes.
    max_start = (kh - 1) * wf_pad + (kw - 1)
    needed = max_start + stride * (s_pad - 1) + 1
    deficit = max(0, needed - hp * wf_pad)
    extra_rows = -(-deficit // wf_pad)
    x_p = jnp.pad(x_nchw, ((0, 0), (0, 0),
                           (padding, padding + extra_rows),
                           (padding, padding + (wf_pad - wf))))
    x_flat = x_p.reshape(n, cin, (hp + extra_rows) * wf_pad).astype(mxu_dtype)

    # --- weights: (Cout, kh*kw*cin) tap-major / channel-minor, padded to kdim_pad ---
    w2d = jnp.transpose(w_oihw, (0, 2, 3, 1)).reshape(cout, kdim)
    w2d = jnp.pad(w2d, ((0, 0), (0, kdim_pad - kdim))).astype(mxu_dtype)

    # --- validity mask over the flat lane axis (drops row-pitch padding columns) ---
    col = jnp.arange(s_pad, dtype=jnp.int32)
    mask1 = ((col % wf_pad) < wo).astype(jnp.float32)
    mask = jnp.tile(mask1, (n,)).reshape(1, n * s_pad)

    apply_bias = bias is not None
    apply_affine = (gamma is not None) or (beta is not None)
    b2 = (bias if apply_bias else jnp.zeros((cout,), jnp.float32)).reshape(cout, 1).astype(jnp.float32)
    g2 = (gamma if gamma is not None else jnp.ones((cout,), jnp.float32)).reshape(cout, 1).astype(jnp.float32)
    be2 = (beta if beta is not None else jnp.zeros((cout,), jnp.float32)).reshape(cout, 1).astype(jnp.float32)

    kernel = functools.partial(
        conv_bn_relu_kernel, stride=stride, kh=kh, kw=kw, wf_pad=wf_pad, s_pad=s_pad,
        ho=ho, wo=wo, cin=cin, group_size=group_size, eps=eps,
        apply_bias=apply_bias, apply_affine=apply_affine)

    out_flat = pl.pallas_call(
        kernel,
        out_shape=jax.ShapeDtypeStruct((n, cout, s_pad), jnp.float32),
        in_specs=[pl.BlockSpec(memory_space=pltpu.MemorySpace.VMEM)] * 6,
        out_specs=pl.BlockSpec(memory_space=pltpu.MemorySpace.VMEM),
        scratch_shapes=[pltpu.VMEM((kdim_pad, n * s_pad), mxu_dtype)],
    )(x_flat, w2d, mask, b2, g2, be2)

    # (N, Cout, Ho*wf_pad) -> (N, Cout, Ho, Wo): free reshape + narrow slice; already NCHW.
    # TODO(synk): at production sizes emit bf16 output / fuse this slice to save the extra
    # XLA pass over the output.
    return out_flat.reshape(n, cout, ho, wf_pad)[:, :, :, :wo]


def reference(x, w, bias, gamma, beta, *, stride, padding, eps=1e-5):
    y = jax.lax.conv_general_dilated(
        x.astype(jnp.float32), w.astype(jnp.float32),
        window_strides=(stride, stride),
        padding=((padding, padding), (padding, padding)),
        dimension_numbers=("NCHW", "OIHW", "NCHW"),
        precision=jax.lax.Precision.HIGHEST)
    if bias is not None:
        y = y + bias.reshape(1, -1, 1, 1)
    mean = jnp.mean(y, axis=(0, 2, 3), keepdims=True)
    var = jnp.mean((y - mean) ** 2, axis=(0, 2, 3), keepdims=True)  # biased, like nn.BatchNorm2d
    y = (y - mean) * jax.lax.rsqrt(var + eps)
    y = y * gamma.reshape(1, -1, 1, 1) + beta.reshape(1, -1, 1, 1)
    return jnp.maximum(y, 0.0)


if __name__ == "__main__":
    # ConvBNReLU(in_channels=4, out_channels=8, kernel_size=3, stride=1, padding=1, bias=False)
    N, CIN, H, W = 2, 4, 16, 16
    COUT, K, STRIDE, PAD = 8, 3, 1, 1

    key = jax.random.PRNGKey(0)
    kx, kw_ = jax.random.split(key, 2)
    x = jax.random.normal(kx, (N, CIN, H, W), dtype=jnp.float32)
    weight = jax.random.normal(kw_, (COUT, CIN, K, K), dtype=jnp.float32) * 0.1
    gamma = jnp.ones((COUT,), jnp.float32)   # BatchNorm2d default affine init
    beta = jnp.zeros((COUT,), jnp.float32)

    ref = reference(x, weight, None, gamma, beta, stride=STRIDE, padding=PAD)

    # exact (f32 MXU operands) path: tight check against the f32 reference
    out_f32 = conv_bn_relu(x, weight, None, gamma, beta, stride=STRIDE, padding=PAD,
                           mxu_dtype=jnp.float32)
    out_f32 = jax.block_until_ready(out_f32)
    assert out_f32.shape == (N, COUT, H, W), out_f32.shape
    assert jnp.allclose(out_f32, ref, atol=1e-3, rtol=1e-3), \
        float(jnp.max(jnp.abs(out_f32 - ref)))

    # default bf16-MXU-operand path (recommended on v6e/v7x): looser check (bf16 quantization)
    out_bf16 = conv_bn_relu(x, weight, None, gamma, beta, stride=STRIDE, padding=PAD,
                            mxu_dtype=jnp.bfloat16)
    out_bf16 = jax.block_until_ready(out_bf16)
    assert out_bf16.shape == (N, COUT, H, W), out_bf16.shape
    assert jnp.allclose(out_bf16, ref, atol=2e-2, rtol=2e-2), \
        float(jnp.max(jnp.abs(out_bf16 - ref)))

    print("KERNEL_OK")
</pallas_src>

<mosaic_0001>
module attributes {stable_mosaic.version = 11 : i64} {
  func.func @conv_bn_relu_kernel(%arg0: memref<2x4x456xf32, #tpu.memory_space<vmem>>, %arg1: memref<8x40xf32, #tpu.memory_space<vmem>>, %arg2: memref<1x768xf32, #tpu.memory_space<vmem>>, %arg3: memref<8x1xf32, #tpu.memory_space<vmem>>, %arg4: memref<8x1xf32, #tpu.memory_space<vmem>>, %arg5: memref<8x1xf32, #tpu.memory_space<vmem>>, %arg6: memref<2x8x384xf32, #tpu.memory_space<vmem>>, %arg7: memref<40x768xf32, #tpu.memory_space<vmem>>) attributes {dimension_semantics = [], scalar_prefetch = 0 : i64, scratch_operands = 1 : i64, tpu.core_type = #tpu.core_type<tc>} {
    %c0 = arith.constant 0 : index
    %c0_0 = arith.constant 0 : index
    %c0_1 = arith.constant 0 : index
    %0 = vector.load %arg0[%c0, %c0_0, %c0_1] : memref<2x4x456xf32, #tpu.memory_space<vmem>>, vector<1x4x384xf32>
    %1 = vector.shape_cast %0 : vector<1x4x384xf32> to vector<4x384xf32>
    %c0_2 = arith.constant 0 : index
    %c0_3 = arith.constant 0 : index
    %c1 = arith.constant 1 : index
    %2 = vector.load %arg0[%c0_2, %c0_3, %c1] : memref<2x4x456xf32, #tpu.memory_space<vmem>>, vector<1x4x384xf32>
    %3 = vector.shape_cast %2 : vector<1x4x384xf32> to vector<4x384xf32>
    %4 = tpu.concatenate %1, %3 in 0 : vector<4x384xf32>, vector<4x384xf32> -> vector<8x384xf32>
    %c0_4 = arith.constant 0 : index
    %c0_5 = arith.constant 0 : index
    %5 = vector.load %arg7[%c0_4, %c0_5] : memref<40x768xf32, #tpu.memory_space<vmem>>, vector<8x384xf32>
    tpu.vector_store %arg7[%c0_4, %c0_5], %4 {strides = array<i32>} : memref<40x768xf32, #tpu.memory_space<vmem>>, vector<8x384xf32>,
    %c0_6 = arith.constant 0 : index
    %c0_7 = arith.constant 0 : index
    %c2 = arith.constant 2 : index
    %6 = vector.load %arg0[%c0_6, %c0_7, %c2] : memref<2x4x456xf32, #tpu.memory_space<vmem>>, vector<1x4x384xf32>
    %7 = vector.shape_cast %6 : vector<1x4x384xf32> to vector<4x384xf32>
    %c0_8 = arith.constant 0 : index
    %c0_9 = arith.constant 0 : index
    %c24 = arith.constant 24 : index
    %8 = vector.load %arg0[%c0_8, %c0_9, %c24] : memref<2x4x456xf32, #tpu.memory_space<vmem>>, vector<1x4x384xf32>
    %9 = vector.shape_cast %8 : vector<1x4x384xf32> to vector<4x384xf32>
    %10 = tpu.concatenate %7, %9 in 0 : vector<4x384xf32>, vector<4x384xf32> -> vector<8x384xf32>
    %c8 = arith.constant 8 : index
    %c0_10 = arith.constant 0 : index
    %11 = vector.load %arg7[%c8, %c0_10] : memref<40x768xf32, #tpu.memory_space<vmem>>, vector<8x384xf32>
    tpu.vector_store %arg7[%c8, %c0_10], %10 {strides = array<i32>} : memref<40x768xf32, #tpu.memory_space<vmem>>, vector<8x384xf32>,
    %c0_11 = arith.constant 0 : index
    %c0_12 = arith.constant 0 : index
    %c25 = arith.constant 25 : index
    %12 = vector.load %arg0[%c0_11, %c0_12, %c25] : memref<2x4x456xf32, #tpu.memory_space<vmem>>, vector<1x4x384xf32>
    %13 = vector.shape_cast %12 : vector<1x4x384xf32> to vector<4x384xf32>
    %c0_13 = arith.constant 0 : index
    %c0_14 = arith.constant 0 : index
    %c26 = arith.constant 26 : index
    %14 = vector.load %arg0[%c0_13, %c0_14, %c26] : memref<2x4x456xf32, #tpu.memory_space<vmem>>, vector<1x4x384xf32>
    %15 = vector.shape_cast %14 : vector<1x4x384xf32> to vector<4x384xf32>
    %16 = tpu.concatenate %13, %15 in 0 : vector<4x384xf32>, vector<4x384xf32> -> vector<8x384xf32>
    %c16 = arith.constant 16 : index
    %c0_15 = arith.constant 0 : index
    %17 = vector.load %arg7[%c16, %c0_15] : memref<40x768xf32, #tpu.memory_space<vmem>>, vector<8x384xf32>
    tpu.vector_store %arg7[%c16, %c0_15], %16 {strides = array<i32>} : memref<40x768xf32, #tpu.memory_space<vmem>>, vector<8x384xf32>,
    %c0_16 = arith.constant 0 : index
    %c0_17 = arith.constant 0 : index
    %c48 = arith.constant 48 : index
    %18 = vector.load %arg0[%c0_16, %c0_17, %c48] : memref<2x4x456xf32, #tpu.memory_space<vmem>>, vector<1x4x384xf32>
    %19 = vector.shape_cast %18 : vector<1x4x384xf32> to vector<4x384xf32>
    %c0_18 = arith.constant 0 : index
    %c0_19 = arith.constant 0 : index
    %c49 = arith.constant 49 : index
    %20 = vector.load %arg0[%c0_18, %c0_19, %c49] : memref<2x4x456xf32, #tpu.memory_space<vmem>>, vector<1x4x384xf32>
    %21 = vector.shape_cast %20 : vector<1x4x384xf32> to vector<4x384xf32>
    %22 = tpu.concatenate %19, %21 in 0 : vector<4x384xf32>, vector<4x384xf32> -> vector<8x384xf32>
    %c24_20 = arith.constant 24 : index
    %c0_21 = arith.constant 0 : index
    %23 = vector.load %arg7[%c24_20, %c0_21] : memref<40x768xf32, #tpu.memory_space<vmem>>, vector<8x384xf32>
    tpu.vector_store %arg7[%c24_20, %c0_21], %22 {strides = array<i32>} : memref<40x768xf32, #tpu.memory_space<vmem>>, vector<8x384xf32>,
    %c0_22 = arith.constant 0 : index
    %c0_23 = arith.constant 0 : index
    %c50 = arith.constant 50 : index
    %24 = vector.load %arg0[%c0_22, %c0_23, %c50] : memref<2x4x456xf32, #tpu.memory_space<vmem>>, vector<1x4x384xf32>
    %25 = vector.shape_cast %24 : vector<1x4x384xf32> to vector<4x384xf32>
    %cst = arith.constant 0.000000e+00 : f32
    %26 = vector.broadcast %cst : f32 to vector<4x384xf32>
    %27 = tpu.concatenate %25, %26 in 0 : vector<4x384xf32>, vector<4x384xf32> -> vector<8x384xf32>
    %c32 = arith.constant 32 : index
    %c0_24 = arith.constant 0 : index
    %28 = vector.load %arg7[%c32, %c0_24] : memref<40x768xf32, #tpu.memory_space<vmem>>, vector<8x384xf32>
    tpu.vector_store %arg7[%c32, %c0_24], %27 {strides = array<i32>} : memref<40x768xf32, #tpu.memory_space<vmem>>, vector<8x384xf32>,
    %c1_25 = arith.constant 1 : index
    %c0_26 = arith.constant 0 : index
    %c0_27 = arith.constant 0 : index
    %29 = vector.load %arg0[%c1_25, %c0_26, %c0_27] : memref<2x4x456xf32, #tpu.memory_space<vmem>>, vector<1x4x384xf32>
    %30 = vector.shape_cast %29 : vector<1x4x384xf32> to vector<4x384xf32>
    %c1_28 = arith.constant 1 : index
    %c0_29 = arith.constant 0 : index
    %c1_30 = arith.constant 1 : index
    %31 = vector.load %arg0[%c1_28, %c0_29, %c1_30] : memref<2x4x456xf32, #tpu.memory_space<vmem>>, vector<1x4x384xf32>
    %32 = vector.shape_cast %31 : vector<1x4x384xf32> to vector<4x384xf32>
    %33 = tpu.concatenate %30, %32 in 0 : vector<4x384xf32>, vector<4x384xf32> -> vector<8x384xf32>
    %c0_31 = arith.constant 0 : index
    %c384 = arith.constant 384 : index
    %34 = vector.load %arg7[%c0_31, %c384] : memref<40x768xf32, #tpu.memory_space<vmem>>, vector<8x384xf32>
    tpu.vector_store %arg7[%c0_31, %c384], %33 {strides = array<i32>} : memref<40x768xf32, #tpu.memory_space<vmem>>, vector<8x384xf32>,
    %c1_32 = arith.constant 1 : index
    %c0_33 = arith.constant 0 : index
    %c2_34 = arith.constant 2 : index
    %35 = vector.load %arg0[%c1_32, %c0_33, %c2_34] : memref<2x4x456xf32, #tpu.memory_space<vmem>>, vector<1x4x384xf32>
    %36 = vector.shape_cast %35 : vector<1x4x384xf32> to vector<4x384xf32>
    %c1_35 = arith.constant 1 : index
    %c0_36 = arith.constant 0 : index
    %c24_37 = arith.constant 24 : index
    %37 = vector.load %arg0[%c1_35, %c0_36, %c24_37] : memref<2x4x456xf32, #tpu.memory_space<vmem>>, vector<1x4x384xf32>
    %38 = vector.shape_cast %37 : vector<1x4x384xf32> to vector<4x384xf32>
    %39 = tpu.concatenate %36, %38 in 0 : vector<4x384xf32>, vector<4x384xf32> -> vector<8x384xf32>
    %c8_38 = arith.constant 8 : index
    %c384_39 = arith.constant 384 : index
    %40 = vector.load %arg7[%c8_38, %c384_39] : memref<40x768xf32, #tpu.memory_space<vmem>>, vector<8x384xf32>
    tpu.vector_store %arg7[%c8_38, %c384_39], %39 {strides = array<i32>} : memref<40x768xf32, #tpu.memory_space<vmem>>, vector<8x384xf32>,
    %c1_40 = arith.constant 1 : index
    %c0_41 = arith.constant 0 : index
    %c25_42 = arith.constant 25 : index
    %41 = vector.load %arg0[%c1_40, %c0_41, %c25_42] : memref<2x4x456xf32, #tpu.memory_space<vmem>>, vector<1x4x384xf32>
    %42 = vector.shape_cast %41 : vector<1x4x384xf32> to vector<4x384xf32>
    %c1_43 = arith.constant 1 : index
    %c0_44 = arith.constant 0 : index
    %c26_45 = arith.constant 26 : index
    %43 = vector.load %arg0[%c1_43, %c0_44, %c26_45] : memref<2x4x456xf32, #tpu.memory_space<vmem>>, vector<1x4x384xf32>
    %44 = vector.shape_cast %43 : vector<1x4x384xf32> to vector<4x384xf32>
    %45 = tpu.concatenate %42, %44 in 0 : vector<4x384xf32>, vector<4x384xf32> -> vector<8x384xf32>
    %c16_46 = arith.constant 16 : index
    %c384_47 = arith.constant 384 : index
    %46 = vector.load %arg7[%c16_46, %c384_47] : memref<40x768xf32, #tpu.memory_space<vmem>>, vector<8x384xf32>
    tpu.vector_store %arg7[%c16_46, %c384_47], %45 {strides = array<i32>} : memref<40x768xf32, #tpu.memory_space<vmem>>, vector<8x384xf32>,
    %c1_48 = arith.constant 1 : index
    %c0_49 = arith.constant 0 : index
    %c48_50 = arith.constant 48 : index
    %47 = vector.load %arg0[%c1_48, %c0_49, %c48_50] : memref<2x4x456xf32, #tpu.memory_space<vmem>>, vector<1x4x384xf32>
    %48 = vector.shape_cast %47 : vector<1x4x384xf32> to vector<4x384xf32>
    %c1_51 = arith.constant 1 : index
    %c0_52 = arith.constant 0 : index
    %c49_53 = arith.constant 49 : index
    %49 = vector.load %arg0[%c1_51, %c0_52, %c49_53] : memref<2x4x456xf32, #tpu.memory_space<vmem>>, vector<1x4x384xf32>
    %50 = vector.shape_cast %49 : vector<1x4x384xf32> to vector<4x384xf32>
    %51 = tpu.concatenate %48, %50 in 0 : vector<4x384xf32>, vector<4x384xf32> -> vector<8x384xf32>
    %c24_54 = arith.constant 24 : index
    %c384_55 = arith.constant 384 : index
    %52 = vector.load %arg7[%c24_54, %c384_55] : memref<40x768xf32, #tpu.memory_space<vmem>>, vector<8x384xf32>
    tpu.vector_store %arg7[%c24_54, %c384_55], %51 {strides = array<i32>} : memref<40x768xf32, #tpu.memory_space<vmem>>, vector<8x384xf32>,
    %c1_56 = arith.constant 1 : index
    %c0_57 = arith.constant 0 : index
    %c50_58 = arith.constant 50 : index
    %53 = vector.load %arg0[%c1_56, %c0_57, %c50_58] : memref<2x4x456xf32, #tpu.memory_space<vmem>>, vector<1x4x384xf32>
    %54 = vector.shape_cast %53 : vector<1x4x384xf32> to vector<4x384xf32>
    %cst_59 = arith.constant 0.000000e+00 : f32
    %55 = vector.broadcast %cst_59 : f32 to vector<4x384xf32>
    %56 = tpu.concatenate %54, %55 in 0 : vector<4x384xf32>, vector<4x384xf32> -> vector<8x384xf32>
    %c32_60 = arith.constant 32 : index
    %c384_61 = arith.constant 384 : index
    %57 = vector.load %arg7[%c32_60, %c384_61] : memref<40x768xf32, #tpu.memory_space<vmem>>, vector<8x384xf32>
    tpu.vector_store %arg7[%c32_60, %c384_61], %56 {strides = array<i32>} : memref<40x768xf32, #tpu.memory_space<vmem>>, vector<8x384xf32>,
    %c0_62 = arith.constant 0 : index
    %c0_63 = arith.constant 0 : index
    %58 = vector.load %arg1[%c0_62, %c0_63] : memref<8x40xf32, #tpu.memory_space<vmem>>, vector<8x40xf32>
    %c0_64 = arith.constant 0 : index
    %c0_65 = arith.constant 0 : index
    %59 = vector.load %arg7[%c0_64, %c0_65] : memref<40x768xf32, #tpu.memory_space<vmem>>, vector<40x768xf32>
    %cst_66 = arith.constant dense<0.000000e+00> : vector<8x768xf32>
    %60 = tpu.matmul %58, %59, %cst_66 {dimension_numbers = #tpu.dot_dimension_numbers<[1], [0], [0], [1], [0, 0, 1, 1], [], []>} : vector<8x40xf32>, vector<40x768xf32>, vector<8x768xf32> -> vector<8x768xf32>
    %c0_67 = arith.constant 0 : index
    %c0_68 = arith.constant 0 : index
    %61 = vector.load %arg2[%c0_67, %c0_68] : memref<1x768xf32, #tpu.memory_space<vmem>>, vector<1x768xf32>
    %62 = vector.broadcast %61 : vector<1x768xf32> to vector<8x768xf32>
    %63 = arith.mulf %60, %62 : vector<8x768xf32>
    %cst_69 = arith.constant dense<0.000000e+00> : vector<8xf32>
    %64 = vector.multi_reduction <add>, %63, %cst_69 [1] : vector<8x768xf32> to vector<8xf32>
    %65 = vector.shape_cast %64 : vector<8xf32> to vector<8x1xf32>
    %cst_70 = arith.constant 0.001953125 : f32
    %66 = vector.broadcast %cst_70 : f32 to vector<8x1xf32>
    %67 = arith.mulf %65, %66 : vector<8x1xf32>
    %68 = arith.mulf %63, %60 : vector<8x768xf32>
    %cst_71 = arith.constant dense<0.000000e+00> : vector<8xf32>
    %69 = vector.multi_reduction <add>, %68, %cst_71 [1] : vector<8x768xf32> to vector<8xf32>
    %70 = vector.shape_cast %69 : vector<8xf32> to vector<8x1xf32>
    %cst_72 = arith.constant 0.001953125 : f32
    %71 = vector.broadcast %cst_72 : f32 to vector<8x1xf32>
    %72 = arith.mulf %70, %71 : vector<8x1xf32>
    %73 = arith.mulf %67, %67 : vector<8x1xf32>
    %74 = arith.subf %72, %73 : vector<8x1xf32>
    %cst_73 = arith.constant 9.99999974E-6 : f32
    %75 = vector.broadcast %cst_73 : f32 to vector<8x1xf32>
    %76 = arith.addf %74, %75 : vector<8x1xf32>
    %77 = math.rsqrt %76 : vector<8x1xf32>
    %c0_74 = arith.constant 0 : index
    %c0_75 = arith.constant 0 : index
    %78 = vector.load %arg4[%c0_74, %c0_75] : memref<8x1xf32, #tpu.memory_space<vmem>>, vector<8x1xf32>
    %79 = arith.mulf %77, %78 : vector<8x1xf32>
    %c0_76 = arith.constant 0 : index
    %c0_77 = arith.constant 0 : index
    %80 = vector.load %arg5[%c0_76, %c0_77] : memref<8x1xf32, #tpu.memory_space<vmem>>, vector<8x1xf32>
    %81 = arith.mulf %67, %79 : vector<8x1xf32>
    %82 = arith.subf %80, %81 : vector<8x1xf32>
    %83 = vector.broadcast %79 : vector<8x1xf32> to vector<8x768xf32>
    %84 = arith.mulf %60, %83 : vector<8x768xf32>
    %85 = vector.broadcast %82 : vector<8x1xf32> to vector<8x768xf32>
    %86 = arith.addf %84, %85 : vector<8x768xf32>
    %cst_78 = arith.constant 0.000000e+00 : f32
    %87 = vector.broadcast %cst_78 : f32 to vector<8x768xf32>
    %88 = arith.maximumf %86, %87 : vector<8x768xf32>
    %89 = vector.extract_strided_slice %88 {offsets = [0, 0], sizes = [8, 384], strides = [1, 1]} : vector<8x768xf32> to vector<8x384xf32>
    %c0_79 = arith.constant 0 : index
    %c0_80 = arith.constant 0 : index
    %c0_81 = arith.constant 0 : index
    %90 = vector.load %arg6[%c0_79, %c0_80, %c0_81] : memref<2x8x384xf32, #tpu.memory_space<vmem>>, vector<1x8x384xf32>
    %91 = vector.shape_cast %90 : vector<1x8x384xf32> to vector<8x384xf32>
    %92 = vector.shape_cast %89 : vector<8x384xf32> to vector<1x8x384xf32>
    tpu.vector_store %arg6[%c0_79, %c0_80, %c0_81], %92 {strides = array<i32>} : memref<2x8x384xf32, #tpu.memory_space<vmem>>, vector<1x8x384xf32>,
    %93 = vector.extract_strided_slice %88 {offsets = [0, 384], sizes = [8, 384], strides = [1, 1]} : vector<8x768xf32> to vector<8x384xf32>
    %c1_82 = arith.constant 1 : index
    %c0_83 = arith.constant 0 : index
    %c0_84 = arith.constant 0 : index
    %94 = vector.load %arg6[%c1_82, %c0_83, %c0_84] : memref<2x8x384xf32, #tpu.memory_space<vmem>>, vector<1x8x384xf32>
    %95 = vector.shape_cast %94 : vector<1x8x384xf32> to vector<8x384xf32>
    %96 = vector.shape_cast %93 : vector<8x384xf32> to vector<1x8x384xf32>
    tpu.vector_store %arg6[%c1_82, %c0_83, %c0_84], %96 {strides = array<i32>} : memref<2x8x384xf32, #tpu.memory_space<vmem>>, vector<1x8x384xf32>,
    return
  }
}

</mosaic_0001>

<llo_original>
// kernel: tpu_custom_call.1
$region0: #{tpu_custom_call.1}
  #allocation0 [shape = 'u32[]', space=smem, size = 0x4, offset = 0x4, fixed_abs, tag = 'smem constant byte address 0x4 - core index']
  #allocation1 [shape = 'u32[144,128]{1,0:T(1,128)}', space=vmem, size = 0x12000, scoped, tag = 'internal scratch']
  #allocation2 [shape = 'f32[40,768]{1,0:T(8,128)}', space=vmem, size = 0x1e000, scoped, tag = 'scratch operand']
  %s0 = inlined_call_operand.hbm [shape: f32[2,4,456], index: 0, kind: input, shape index: {}]
  %s1 = inlined_call_operand.vmem [shape: f32[8,40], index: 1, kind: input, shape index: {}]
  %s2 = inlined_call_operand.vmem [shape: f32[1,768], index: 2, kind: input, shape index: {}]
  %s3 = inlined_call_operand.vmem [shape: f32[8,1], index: 3, kind: input, shape index: {}]
  %s4 = inlined_call_operand.vmem [shape: f32[8,1], index: 4, kind: input, shape index: {}]
  %s5 = inlined_call_operand.vmem [shape: f32[8,1], index: 5, kind: input, shape index: {}]
  %s6 = inlined_call_operand.hbm [shape: f32[2,8,384], index: 6, kind: output, shape index: {}]
  %s7 = sld [smem:[#allocation0]]
  $region38: #{tpu_custom_call.1} parent=0
    _
  %s9 = ssub.s32 1, %s7
  %s10 = scalar_select 0, %s9, %s7
  $region1: #{tpu_custom_call.1} parent=0
    #allocation3 [shape = 'u8[16384]{0}', space=vmem, size = 0x4000, scoped, tag = 'input window, operand 0, single buffered']
    #allocation4 [shape = 's32[1]{0}', space=sflag, size = 0x4, scoped, tag = 'scoped memory for tpu_custom_call.1']
    #allocation5 [shape = 's32[1]{0}', space=sflag, size = 0x4, scoped, tag = 'scoped memory for tpu_custom_call.1']
    #allocation6 [shape = 'u8[24576]{0}', space=vmem, size = 0x6000, scoped, tag = 'output window, operand 0, single buffered']
    %11 = vsyncpa [#allocation4], 0
    %12 = vsyncpa [#allocation5], 0
    // Predicated region
    $region2: #{tpu_custom_call.1} parent=1 // pred_check
      _
    $region3: #{tpu_custom_call.1} parent=1 // pred_check_branch
      %14 = sbr.rel (0) target = $region5
    $region4: #{tpu_custom_call.1} parent=1 // pred_region
      %s16 = ssub.s32 512, 512
      %17 = vsyncadd [#allocation4], %s16
      %s18 = sshll.u32 [#allocation3], 4
      %s19 = int_to_ptr.vmem [resolvable:$true] %s18
      %24 = dma.hbm_to_vmem [thread:$0]  %s0, 512, %s19, [#allocation4], 256, 256, 16
    $region5: #{tpu_custom_call.1} parent=1 // pred_fallthru
      _
    // Predicated region
    $region6: #{tpu_custom_call.1} parent=1 // pred_check
      _
    $region7: #{tpu_custom_call.1} parent=1 // pred_check_branch
      %26 = sbr.rel (0) target = $region9
    $region8: #{tpu_custom_call.1} parent=1 // pred_region
      _
    $region9: #{tpu_custom_call.1} parent=1 // pred_fallthru
      _
    // Predicated region
    $region10: #{tpu_custom_call.1} parent=1 // pred_check
      _
    $region11: #{tpu_custom_call.1} parent=1 // pred_check_branch
      %28 = sbr.rel (0) target = $region13
    $region12: #{tpu_custom_call.1} parent=1 // pred_region
      _
    $region13: #{tpu_custom_call.1} parent=1 // pred_fallthru
      _
    // Predicated region
    $region14: #{tpu_custom_call.1} parent=1 // pred_check
      _
    $region15: #{tpu_custom_call.1} parent=1 // pred_check_branch
      %30 = sbr.rel (0) target = $region17
    $region16: #{tpu_custom_call.1} parent=1 // pred_region
      _
    $region17: #{tpu_custom_call.1} parent=1 // pred_fallthru
      _
    // Predicated region
    $region18: #{tpu_custom_call.1} parent=1 // pred_check
      _
    $region19: #{tpu_custom_call.1} parent=1 // pred_check_branch
      %32 = sbr.rel (0) target = $region21
    $region20: #{tpu_custom_call.1} parent=1 // pred_region
      _
    $region21: #{tpu_custom_call.1} parent=1 // pred_fallthru
      _
    // Predicated region
    $region22: #{tpu_custom_call.1} parent=1 // pred_check
      _
    $region23: #{tpu_custom_call.1} parent=1 // pred_check_branch
      %34 = sbr.rel (0) target = $region25
    $region24: #{tpu_custom_call.1} parent=1 // pred_region
      _
    $region25: #{tpu_custom_call.1} parent=1 // pred_fallthru
      _
    // Predicated region
    $region26: #{tpu_custom_call.1} parent=1 // pred_check
      _
    $region27: #{tpu_custom_call.1} parent=1 // pred_check_branch
      %36 = sbr.rel (0) target = $region29
    $region28: #{tpu_custom_call.1} parent=1 // pred_region
      %37 = dma.done [#allocation4], 512
    $region29: #{tpu_custom_call.1} parent=1 // pred_fallthru
      _
    %v38 = vld [vmem:[#allocation3] sm:$0xff]
    %v39 = vld [vmem:[#allocation3 + $0x8] sm:$0xf]
    %v40 = vld [vmem:[#allocation3 + $0x8] sm:$0xff]
    %v42 = vcombine.high %v38, %v38
    %v45 = vcombine.low %v38, %v38
    %v46 = vcombine.low %v40, %v40
    %47 = vrot.lane.b32.xlu0 %v45, 127
    %v48 = vpop.permute.xlu0 %47
    %49 = vrot.lane.b32.xlu0 %v38, 127
    %v50 = vpop.permute.xlu0 %49
    %51 = vrot.lane.b32.xlu0 %v46, 127
    %v52 = vpop.permute.xlu0 %51
    %53 = vrot.lane.b32.xlu0 %v40, 127
    %v54 = vpop.permute.xlu0 %53
    %vm55 = vcmask 1039360
    %v56 = vsel %vm55, %v48, %v50
    %v57 = vsel %vm55, %v50, %v52
    %v58 = vsel %vm55, %v52, %v54
    %vm62 = vcmask 1043456
    %v63 = vsel %vm62, %v38, %v56
    %v64 = vsel %vm62, %v42, %v57
    %v65 = vsel %vm62, %v39, %v58
    %66 = vst [vmem:[#allocation2] sm:$0xff] %v63
    %67 = vst [vmem:[#allocation2 + $0x8] sm:$0xff] %v64
    %68 = vst [vmem:[#allocation2 + $0x10] sm:$0xff] %v65
    %v69 = vld [vmem:[#allocation3] sm:$0xff]
    %v70 = vld [vmem:[#allocation3 + $0x8] sm:$0xff]
    %v73 = vcombine.high %v69, %v69
    %v74 = vcombine.high %v70, %v70
    %v77 = vcombine.low %v69, %v69
    %v78 = vcombine.low %v70, %v70
    %79 = vrot.lane.b32.xlu0 %v77, 106
    %v80 = vpop.permute.xlu0 %79
    %81 = vrot.lane.b32.xlu0 %v69, 106
    %v82 = vpop.permute.xlu0 %81
    %83 = vrot.lane.b32.xlu0 %v78, 106
    %v84 = vpop.permute.xlu0 %83
    %85 = vrot.lane.b32.xlu0 %v70, 106
    %v86 = vpop.permute.xlu0 %85
    %vm87 = vcmask 867328
    %v88 = vsel %vm87, %v80, %v82
    %v89 = vsel %vm87, %v82, %v84
    %v90 = vsel %vm87, %v84, %v86
    %v95 = vsel %vm62, %v69, %v88
    %v96 = vsel %vm62, %v73, %v89
    %v97 = vsel %vm62, %v70, %v90
    %v98 = vsel %vm62, %v74, %v86
    %103 = vrot.lane.b32.xlu0 %v95, 126
    %v104 = vpop.permute.xlu0 %103
    %105 = vrot.lane.b32.xlu0 %v96, 126
    %v106 = vpop.permute.xlu0 %105
    %107 = vrot.lane.b32.xlu0 %v97, 126
    %v108 = vpop.permute.xlu0 %107
    %109 = vrot.lane.b32.xlu0 %v98, 126
    %v110 = vpop.permute.xlu0 %109
    %vm111 = vcmask 1031168
    %v112 = vsel %vm111, %v104, %v106
    %v113 = vsel %vm111, %v106, %v108
    %v114 = vsel %vm111, %v108, %v110
    %118 = vst [vmem:[#allocation2 + $0x30] sm:$0xff] %v112
    %119 = vst [vmem:[#allocation2 + $0x38] sm:$0xff] %v113
    %120 = vst [vmem:[#allocation2 + $0x40] sm:$0xff] %v114
    %v121 = vld [vmem:[#allocation3] sm:$0xff]
    %v122 = vld [vmem:[#allocation3 + $0x8] sm:$0xff]
    %v125 = vcombine.high %v121, %v121
    %v126 = vcombine.high %v122, %v122
    %v129 = vcombine.low %v121, %v121
    %v130 = vcombine.low %v122, %v122
    %131 = vrot.lane.b32.xlu0 %v129, 127
    %v132 = vpop.permute.xlu0 %131
    %133 = vrot.lane.b32.xlu0 %v121, 127
    %v134 = vpop.permute.xlu0 %133
    %135 = vrot.lane.b32.xlu0 %v130, 127
    %v136 = vpop.permute.xlu0 %135
    %137 = vrot.lane.b32.xlu0 %v122, 127
    %v138 = vpop.permute.xlu0 %137
    %v139 = vsel %vm55, %v132, %v134
    %v140 = vsel %vm55, %v134, %v136
    %v141 = vsel %vm55, %v136, %v138
    %v146 = vsel %vm62, %v121, %v139
    %v147 = vsel %vm62, %v125, %v140
    %v148 = vsel %vm62, %v122, %v141
    %v149 = vsel %vm62, %v126, %v138
    %154 = vrot.lane.b32.xlu0 %v146, 103
    %v155 = vpop.permute.xlu0 %154
    %156 = vrot.lane.b32.xlu0 %v147, 103
    %v157 = vpop.permute.xlu0 %156
    %158 = vrot.lane.b32.xlu0 %v148, 103
    %v159 = vpop.permute.xlu0 %158
    %160 = vrot.lane.b32.xlu0 %v149, 103
    %v161 = vpop.permute.xlu0 %160
    %vm162 = vcmask 842752
    %v163 = vsel %vm162, %v155, %v157
    %v164 = vsel %vm162, %v157, %v159
    %v165 = vsel %vm162, %v159, %v161
    %169 = vst [vmem:[#allocation2 + $0x60] sm:$0xff] %v163
    %170 = vst [vmem:[#allocation2 + $0x68] sm:$0xff] %v164
    %171 = vst [vmem:[#allocation2 + $0x70] sm:$0xff] %v165
    %v172 = vld [vmem:[#allocation3] sm:$0xff]
    %v173 = vld [vmem:[#allocation3 + $0x8] sm:$0xff]
    %v176 = vcombine.high %v172, %v172
    %v177 = vcombine.high %v173, %v173
    %v180 = vcombine.low %v172, %v172
    %v181 = vcombine.low %v173, %v173
    %182 = vrot.lane.b32.xlu0 %v180, 127
    %v183 = vpop.permute.xlu0 %182
    %184 = vrot.lane.b32.xlu0 %v172, 127
    %v185 = vpop.permute.xlu0 %184
    %186 = vrot.lane.b32.xlu0 %v181, 127
    %v187 = vpop.permute.xlu0 %186
    %188 = vrot.lane.b32.xlu0 %v173, 127
    %v189 = vpop.permute.xlu0 %188
    %v190 = vsel %vm55, %v183, %v185
    %v191 = vsel %vm55, %v185, %v187
    %v192 = vsel %vm55, %v187, %v189
    %v197 = vsel %vm62, %v172, %v190
    %v198 = vsel %vm62, %v176, %v191
    %v199 = vsel %vm62, %v173, %v192
    %v200 = vsel %vm62, %v177, %v189
    %205 = vrot.lane.b32.xlu0 %v197, 80
    %v206 = vpop.permute.xlu0 %205
    %207 = vrot.lane.b32.xlu0 %v198, 80
    %v208 = vpop.permute.xlu0 %207
    %209 = vrot.lane.b32.xlu0 %v199, 80
    %v210 = vpop.permute.xlu0 %209
    %211 = vrot.lane.b32.xlu0 %v200, 80
    %v212 = vpop.permute.xlu0 %211
    %vm213 = vcmask 654336
    %v214 = vsel %vm213, %v206, %v208
    %v215 = vsel %vm213, %v208, %v210
    %v216 = vsel %vm213, %v210, %v212
    %220 = vst [vmem:[#allocation2 + $0x90] sm:$0xff] %v214
    %221 = vst [vmem:[#allocation2 + $0x98] sm:$0xff] %v215
    %222 = vst [vmem:[#allocation2 + $0xa0] sm:$0xff] %v216
    %v223 = vld [vmem:[#allocation3] sm:$0xff]
    %v224 = vld [vmem:[#allocation3 + $0x8] sm:$0xff]
    %v227 = vcombine.high %v223, %v223
    %v228 = vcombine.high %v224, %v224
    %v231 = vsel %vm62, %v223, 0.0
    %v232 = vsel %vm62, %v227, 0.0
    %v233 = vsel %vm62, %v224, 0.0
    %v234 = vsel %vm62, %v228, 0.0
    %239 = vrot.lane.b32.xlu0 %v231, 78
    %v240 = vpop.permute.xlu0 %239
    %241 = vrot.lane.b32.xlu0 %v232, 78
    %v242 = vpop.permute.xlu0 %241
    %243 = vrot.lane.b32.xlu0 %v233, 78
    %v244 = vpop.permute.xlu0 %243
    %245 = vrot.lane.b32.xlu0 %v234, 78
    %v246 = vpop.permute.xlu0 %245
    %vm247 = vcmask 637952
    %v248 = vsel %vm247, %v240, %v242
    %v249 = vsel %vm247, %v242, %v244
    %v250 = vsel %vm247, %v244, %v246
    %254 = vst [vmem:[#allocation2 + $0xc0] sm:$0xff] %v248
    %255 = vst [vmem:[#allocation2 + $0xc8] sm:$0xff] %v249
    %256 = vst [vmem:[#allocation2 + $0xd0] sm:$0xff] %v250
    %s257 = scalar_lea.vmem [#allocation3], 16
    %v258 = vld [vmem:[%s257] sm:$0xff]
    %v259 = vld [vmem:[%s257 + $0x8] sm:$0xf]
    %v260 = vld [vmem:[%s257 + $0x8] sm:$0xff]
    %v262 = vcombine.high %v258, %v258
    %v265 = vcombine.low %v258, %v258
    %v266 = vcombine.low %v260, %v260
    %267 = vrot.lane.b32.xlu0 %v265, 127
    %v268 = vpop.permute.xlu0 %267
    %269 = vrot.lane.b32.xlu0 %v258, 127
    %v270 = vpop.permute.xlu0 %269
    %271 = vrot.lane.b32.xlu0 %v266, 127
    %v272 = vpop.permute.xlu0 %271
    %273 = vrot.lane.b32.xlu0 %v260, 127
    %v274 = vpop.permute.xlu0 %273
    %v275 = vsel %vm55, %v268, %v270
    %v276 = vsel %vm55, %v270, %v272
    %v277 = vsel %vm55, %v272, %v274
    %v281 = vsel %vm62, %v258, %v275
    %v282 = vsel %vm62, %v262, %v276
    %v283 = vsel %vm62, %v259, %v277
    %284 = vst [vmem:[#allocation2 + $0x18] sm:$0xff] %v281
    %285 = vst [vmem:[#allocation2 + $0x20] sm:$0xff] %v282
    %286 = vst [vmem:[#allocation2 + $0x28] sm:$0xff] %v283
    %v287 = vld [vmem:[%s257] sm:$0xff]
    %v288 = vld [vmem:[%s257 + $0x8] sm:$0xff]
    %v291 = vcombine.high %v287, %v287
    %v292 = vcombine.high %v288, %v288
    %v295 = vcombine.low %v287, %v287
    %v296 = vcombine.low %v288, %v288
    %297 = vrot.lane.b32.xlu0 %v295, 106
    %v298 = vpop.permute.xlu0 %297
    %299 = vrot.lane.b32.xlu0 %v287, 106
    %v300 = vpop.permute.xlu0 %299
    %301 = vrot.lane.b32.xlu0 %v296, 106
    %v302 = vpop.permute.xlu0 %301
    %303 = vrot.lane.b32.xlu0 %v288, 106
    %v304 = vpop.permute.xlu0 %303
    %v305 = vsel %vm87, %v298, %v300
    %v306 = vsel %vm87, %v300, %v302
    %v307 = vsel %vm87, %v302, %v304
    %v312 = vsel %vm62, %v287, %v305
    %v313 = vsel %vm62, %v291, %v306
    %v314 = vsel %vm62, %v288, %v307
    %v315 = vsel %vm62, %v292, %v304
    %320 = vrot.lane.b32.xlu0 %v312, 126
    %v321 = vpop.permute.xlu0 %320
    %322 = vrot.lane.b32.xlu0 %v313, 126
    %v323 = vpop.permute.xlu0 %322
    %324 = vrot.lane.b32.xlu0 %v314, 126
    %v325 = vpop.permute.xlu0 %324
    %326 = vrot.lane.b32.xlu0 %v315, 126
    %v327 = vpop.permute.xlu0 %326
    %v328 = vsel %vm111, %v321, %v323
    %v329 = vsel %vm111, %v323, %v325
    %v330 = vsel %vm111, %v325, %v327
    %334 = vst [vmem:[#allocation2 + $0x48] sm:$0xff] %v328
    %335 = vst [vmem:[#allocation2 + $0x50] sm:$0xff] %v329
    %336 = vst [vmem:[#allocation2 + $0x58] sm:$0xff] %v330
    %v337 = vld [vmem:[%s257] sm:$0xff]
    %v338 = vld [vmem:[%s257 + $0x8] sm:$0xff]
    %v341 = vcombine.high %v337, %v337
    %v342 = vcombine.high %v338, %v338
    %v345 = vcombine.low %v337, %v337
    %v346 = vcombine.low %v338, %v338
    %347 = vrot.lane.b32.xlu0 %v345, 127
    %v348 = vpop.permute.xlu0 %347
    %349 = vrot.lane.b32.xlu0 %v337, 127
    %v350 = vpop.permute.xlu0 %349
    %351 = vrot.lane.b32.xlu0 %v346, 127
    %v352 = vpop.permute.xlu0 %351
    %353 = vrot.lane.b32.xlu0 %v338, 127
    %v354 = vpop.permute.xlu0 %353
    %v355 = vsel %vm55, %v348, %v350
    %v356 = vsel %vm55, %v350, %v352
    %v357 = vsel %vm55, %v352, %v354
    %v362 = vsel %vm62, %v337, %v355
    %v363 = vsel %vm62, %v341, %v356
    %v364 = vsel %vm62, %v338, %v357
    %v365 = vsel %vm62, %v342, %v354
    %370 = vrot.lane.b32.xlu0 %v362, 103
    %v371 = vpop.permute.xlu0 %370
    %372 = vrot.lane.b32.xlu0 %v363, 103
    %v373 = vpop.permute.xlu0 %372
    %374 = vrot.lane.b32.xlu0 %v364, 103
    %v375 = vpop.permute.xlu0 %374
    %376 = vrot.lane.b32.xlu0 %v365, 103
    %v377 = vpop.permute.xlu0 %376
    %v378 = vsel %vm162, %v371, %v373
    %v379 = vsel %vm162, %v373, %v375
    %v380 = vsel %vm162, %v375, %v377
    %384 = vst [vmem:[#allocation2 + $0x78] sm:$0xff] %v378
    %385 = vst [vmem:[#allocation2 + $0x80] sm:$0xff] %v379
    %386 = vst [vmem:[#allocation2 + $0x88] sm:$0xff] %v380
    %v387 = vld [vmem:[%s257] sm:$0xff]
    %v388 = vld [vmem:[%s257 + $0x8] sm:$0xff]
    %v391 = vcombine.high %v387, %v387
    %v392 = vcombine.high %v388, %v388
    %v395 = vcombine.low %v387, %v387
    %v396 = vcombine.low %v388, %v388
    %397 = vrot.lane.b32.xlu0 %v395, 127
    %v398 = vpop.permute.xlu0 %397
    %399 = vrot.lane.b32.xlu0 %v387, 127
    %v400 = vpop.permute.xlu0 %399
    %401 = vrot.lane.b32.xlu0 %v396, 127
    %v402 = vpop.permute.xlu0 %401
    %403 = vrot.lane.b32.xlu0 %v388, 127
    %v404 = vpop.permute.xlu0 %403
    %v405 = vsel %vm55, %v398, %v400
    %v406 = vsel %vm55, %v400, %v402
    %v407 = vsel %vm55, %v402, %v404
    %v412 = vsel %vm62, %v387, %v405
    %v413 = vsel %vm62, %v391, %v406
    %v414 = vsel %vm62, %v388, %v407
    %v415 = vsel %vm62, %v392, %v404
    %420 = vrot.lane.b32.xlu0 %v412, 80
    %v421 = vpop.permute.xlu0 %420
    %422 = vrot.lane.b32.xlu0 %v413, 80
    %v423 = vpop.permute.xlu0 %422
    %424 = vrot.lane.b32.xlu0 %v414, 80
    %v425 = vpop.permute.xlu0 %424
    %426 = vrot.lane.b32.xlu0 %v415, 80
    %v427 = vpop.permute.xlu0 %426
    %v428 = vsel %vm213, %v421, %v423
    %v429 = vsel %vm213, %v423, %v425
    %v430 = vsel %vm213, %v425, %v427
    %434 = vst [vmem:[#allocation2 + $0xa8] sm:$0xff] %v428
    %435 = vst [vmem:[#allocation2 + $0xb0] sm:$0xff] %v429
    %436 = vst [vmem:[#allocation2 + $0xb8] sm:$0xff] %v430
    %v437 = vld [vmem:[%s257] sm:$0xff]
    %v438 = vld [vmem:[%s257 + $0x8] sm:$0xff]
    %v441 = vcombine.high %v437, %v437
    %v442 = vcombine.high %v438, %v438
    %v445 = vsel %vm62, %v437, 0.0
    %v446 = vsel %vm62, %v441, 0.0
    %v447 = vsel %vm62, %v438, 0.0
    %v448 = vsel %vm62, %v442, 0.0
    %453 = vrot.lane.b32.xlu0 %v445, 78
    %v454 = vpop.permute.xlu0 %453
    %455 = vrot.lane.b32.xlu0 %v446, 78
    %v456 = vpop.permute.xlu0 %455
    %457 = vrot.lane.b32.xlu0 %v447, 78
    %v458 = vpop.permute.xlu0 %457
    %459 = vrot.lane.b32.xlu0 %v448, 78
    %v460 = vpop.permute.xlu0 %459
    %v461 = vsel %vm247, %v454, %v456
    %v462 = vsel %vm247, %v456, %v458
    %v463 = vsel %vm247, %v458, %v460
    %467 = vst [vmem:[#allocation2 + $0xd8] sm:$0xff] %v461
    %468 = vst [vmem:[#allocation2 + $0xe0] sm:$0xff] %v462
    %469 = vst [vmem:[#allocation2 + $0xe8] sm:$0xff] %v463
    %v470 = vld [vmem:[%s1] sm:$0xff]
    %v471 = vld [vmem:[#allocation2] sm:$0xff]
    %v472 = vld [vmem:[#allocation2 + $0x8] sm:$0xff]
    %v473 = vld [vmem:[#allocation2 + $0x10] sm:$0xff]
    %v474 = vld [vmem:[#allocation2 + $0x18] sm:$0xff]
    %v475 = vld [vmem:[#allocation2 + $0x20] sm:$0xff]
    %v476 = vld [vmem:[#allocation2 + $0x28] sm:$0xff]
    %v477 = vld [vmem:[#allocation2 + $0x30] sm:$0xff]
    %v478 = vld [vmem:[#allocation2 + $0x38] sm:$0xff]
    %v479 = vld [vmem:[#allocation2 + $0x40] sm:$0xff]
    %v480 = vld [vmem:[#allocation2 + $0x48] sm:$0xff]
    %v481 = vld [vmem:[#allocation2 + $0x50] sm:$0xff]
    %v482 = vld [vmem:[#allocation2 + $0x58] sm:$0xff]
    %v483 = vld [vmem:[#allocation2 + $0x60] sm:$0xff]
    %v484 = vld [vmem:[#allocation2 + $0x68] sm:$0xff]
    %v485 = vld [vmem:[#allocation2 + $0x70] sm:$0xff]
    %v486 = vld [vmem:[#allocation2 + $0x78] sm:$0xff]
    %v487 = vld [vmem:[#allocation2 + $0x80] sm:$0xff]
    %v488 = vld [vmem:[#allocation2 + $0x88] sm:$0xff]
    %v489 = vld [vmem:[#allocation2 + $0x90] sm:$0xff]
    %v490 = vld [vmem:[#allocation2 + $0x98] sm:$0xff]
    %v491 = vld [vmem:[#allocation2 + $0xa0] sm:$0xff]
    %v492 = vld [vmem:[#allocation2 + $0xa8] sm:$0xff]
    %v493 = vld [vmem:[#allocation2 + $0xb0] sm:$0xff]
    %v494 = vld [vmem:[#allocation2 + $0xb8] sm:$0xff]
    %v495 = vld [vmem:[#allocation2 + $0xc0] sm:$0xff]
    %v496 = vld [vmem:[#allocation2 + $0xc8] sm:$0xff]
    %v497 = vld [vmem:[#allocation2 + $0xd0] sm:$0xff]
    %v498 = vld [vmem:[#allocation2 + $0xd8] sm:$0xff]
    %v499 = vld [vmem:[#allocation2 + $0xe0] sm:$0xff]
    %v500 = vld [vmem:[#allocation2 + $0xe8] sm:$0xff]
    %vm501 = vcmask 326656
    %v503 = vsel %vm501, %v470, 0
    %505 = vmatprep.subr.mxu0 0.0
    %506 = vmatpush1.msra.mxu0 0.0
    %507 = vmatprep.subr.mxu0 0.0
    %508 = vmatpush1.msra.mxu0 0.0
    %509 = vmatprep.subr.mxu0 0.0
    %510 = vmatpush1.msra.mxu0 0.0
    %511 = vmatprep.subr.mxu0 0.0
    %512 = vmatpush1.msra.mxu0 0.0
    %513 = vmatprep.subr.mxu0 0.0
    %514 = vmatpush1.msra.mxu0 0.0
    %515 = vmatprep.subr.mxu0 0.0
    %516 = vmatpush1.msra.mxu0 0.0
    %517 = vmatprep.subr.mxu0 0.0
    %518 = vmatpush1.msra.mxu0 0.0
    %519 = vmatprep.subr.mxu0 0.0
    %520 = vmatpush1.msra.mxu0 0.0
    %521 = vmatprep.subr.mxu0 0.0
    %522 = vmatpush1.msra.mxu0 0.0
    %523 = vmatprep.subr.mxu0 0.0
    %524 = vmatpush1.msra.mxu0 0.0
    %525 = vmatprep.subr.mxu0 0.0
    %526 = vmatpush1.msra.mxu0 0.0
    %527 = vmatprep.subr.mxu0 %v496
    %528 = vmatpush1.msra.mxu0 %v495
    %529 = vmatprep.subr.mxu0 %v490
    %530 = vmatpush1.msra.mxu0 %v489
    %531 = vmatprep.subr.mxu0 %v484
    %532 = vmatpush1.msra.mxu0 %v483
    %533 = vmatprep.subr.mxu0 %v478
    %534 = vmatpush1.msra.mxu0 %v477
    %535 = vmatprep.subr.mxu0 %v472
    %536 = vmatpush1.msra.mxu0 %v471
    %537 = vmatprep.subr.mxu0 0.0
    %538 = vmatpush2.msra.mxu0 0.0
    %539 = vmatprep.subr.mxu0 0.0
    %540 = vmatpush2.msra.mxu0 0.0
    %541 = vmatprep.subr.mxu0 0.0
    %542 = vmatpush2.msra.mxu0 0.0
    %543 = vmatprep.subr.mxu0 0.0
    %544 = vmatpush2.msra.mxu0 0.0
    %545 = vmatprep.subr.mxu0 0.0
    %546 = vmatpush2.msra.mxu0 0.0
    %547 = vmatprep.subr.mxu0 0.0
    %548 = vmatpush2.msra.mxu0 0.0
    %549 = vmatprep.subr.mxu0 0.0
    %550 = vmatpush2.msra.mxu0 0.0
    %551 = vmatprep.subr.mxu0 0.0
    %552 = vmatpush2.msra.mxu0 0.0
    %553 = vmatprep.subr.mxu0 0.0
    %554 = vmatpush2.msra.mxu0 0.0
    %555 = vmatprep.subr.mxu0 0.0
    %556 = vmatpush2.msra.mxu0 0.0
    %557 = vmatprep.subr.mxu0 0.0
    %558 = vmatpush2.msra.mxu0 0.0
    %559 = vmatprep.subr.mxu0 0.0
    %560 = vmatpush2.msra.mxu0 0.0
    %561 = vmatprep.subr.mxu0 0.0
    %562 = vmatpush2.msra.mxu0 0.0
    %563 = vmatprep.subr.mxu0 0.0
    %564 = vmatpush2.msra.mxu0 0.0
    %565 = vmatprep.subr.mxu0 0.0
    %566 = vmatpush2.msra.mxu0 0.0
    %567 = vmatprep.subr.mxu0 0.0
    %568 = vmatpush2.msra.mxu0 0.0
    %569 = vmatprep.mubr.f32.mxu0 0.0
    %570 = vmatmul.mubr.f32.gmra.mxu0 %v503
    %v571 = vpop.f32.mrf.mxu0
    %v572 = vadd.f32 0.0, %v571
    %v573 = vpop.f32.mrf.mxu0
    %v574 = vadd.f32 0.0, %v573
    %575 = vdwg.mxu0
    %576 = vmatprep.subr.mxu0 0.0
    %577 = vmatpush1.msra.mxu0 0.0
    %578 = vmatprep.subr.mxu0 0.0
    %579 = vmatpush1.msra.mxu0 0.0
    %580 = vmatprep.subr.mxu0 0.0
    %581 = vmatpush1.msra.mxu0 0.0
    %582 = vmatprep.subr.mxu0 0.0
    %583 = vmatpush1.msra.mxu0 0.0
    %584 = vmatprep.subr.mxu0 0.0
    %585 = vmatpush1.msra.mxu0 0.0
    %586 = vmatprep.subr.mxu0 0.0
    %587 = vmatpush1.msra.mxu0 0.0
    %588 = vmatprep.subr.mxu0 0.0
    %589 = vmatpush1.msra.mxu0 0.0
    %590 = vmatprep.subr.mxu0 0.0
    %591 = vmatpush1.msra.mxu0 0.0
    %592 = vmatprep.subr.mxu0 0.0
    %593 = vmatpush1.msra.mxu0 0.0
    %594 = vmatprep.subr.mxu0 0.0
    %595 = vmatpush1.msra.mxu0 0.0
    %596 = vmatprep.subr.mxu0 0.0
    %597 = vmatpush1.msra.mxu0 0.0
    %598 = vmatprep.subr.mxu0 %v498
    %599 = vmatpush1.msra.mxu0 %v497
    %600 = vmatprep.subr.mxu0 %v492
    %601 = vmatpush1.msra.mxu0 %v491
    %602 = vmatprep.subr.mxu0 %v486
    %603 = vmatpush1.msra.mxu0 %v485
    %604 = vmatprep.subr.mxu0 %v480
    %605 = vmatpush1.msra.mxu0 %v479
    %606 = vmatprep.subr.mxu0 %v474
    %607 = vmatpush1.msra.mxu0 %v473
    %608 = vmatprep.subr.mxu0 0.0
    %609 = vmatpush2.msra.mxu0 0.0
    %610 = vmatprep.subr.mxu0 0.0
    %611 = vmatpush2.msra.mxu0 0.0
    %612 = vmatprep.subr.mxu0 0.0
    %613 = vmatpush2.msra.mxu0 0.0
    %614 = vmatprep.subr.mxu0 0.0
    %615 = vmatpush2.msra.mxu0 0.0
    %616 = vmatprep.subr.mxu0 0.0
    %617 = vmatpush2.msra.mxu0 0.0
    %618 = vmatprep.subr.mxu0 0.0
    %619 = vmatpush2.msra.mxu0 0.0
    %620 = vmatprep.subr.mxu0 0.0
    %621 = vmatpush2.msra.mxu0 0.0
    %622 = vmatprep.subr.mxu0 0.0
    %623 = vmatpush2.msra.mxu0 0.0
    %624 = vmatprep.subr.mxu0 0.0
    %625 = vmatpush2.msra.mxu0 0.0
    %626 = vmatprep.subr.mxu0 0.0
    %627 = vmatpush2.msra.mxu0 0.0
    %628 = vmatprep.subr.mxu0 0.0
    %629 = vmatpush2.msra.mxu0 0.0
    %630 = vmatprep.subr.mxu0 0.0
    %631 = vmatpush2.msra.mxu0 0.0
    %632 = vmatprep.subr.mxu0 0.0
    %633 = vmatpush2.msra.mxu0 0.0
    %634 = vmatprep.subr.mxu0 0.0
    %635 = vmatpush2.msra.mxu0 0.0
    %636 = vmatprep.subr.mxu0 0.0
    %637 = vmatpush2.msra.mxu0 0.0
    %638 = vmatprep.subr.mxu0 0.0
    %639 = vmatpush2.msra.mxu0 0.0
    %640 = vmatprep.mubr.f32.mxu0 0.0
    %641 = vmatmul.mubr.f32.gmra.mxu0 %v503
    %v642 = vpop.f32.mrf.mxu0
    %v643 = vadd.f32 0.0, %v642
    %v644 = vpop.f32.mrf.mxu0
    %v645 = vadd.f32 0.0, %v644
    %646 = vdwg.mxu0
    %647 = vmatprep.subr.mxu0 0.0
    %648 = vmatpush1.msra.mxu0 0.0
    %649 = vmatprep.subr.mxu0 0.0
    %650 = vmatpush1.msra.mxu0 0.0
    %651 = vmatprep.subr.mxu0 0.0
    %652 = vmatpush1.msra.mxu0 0.0
    %653 = vmatprep.subr.mxu0 0.0
    %654 = vmatpush1.msra.mxu0 0.0
    %655 = vmatprep.subr.mxu0 0.0
    %656 = vmatpush1.msra.mxu0 0.0
    %657 = vmatprep.subr.mxu0 0.0
    %658 = vmatpush1.msra.mxu0 0.0
    %659 = vmatprep.subr.mxu0 0.0
    %660 = vmatpush1.msra.mxu0 0.0
    %661 = vmatprep.subr.mxu0 0.0
    %662 = vmatpush1.msra.mxu0 0.0
    %663 = vmatprep.subr.mxu0 0.0
    %664 = vmatpush1.msra.mxu0 0.0
    %665 = vmatprep.subr.mxu0 0.0
    %666 = vmatpush1.msra.mxu0 0.0
    %667 = vmatprep.subr.mxu0 0.0
    %668 = vmatpush1.msra.mxu0 0.0
    %669 = vmatprep.subr.mxu0 %v500
    %670 = vmatpush1.msra.mxu0 %v499
    %671 = vmatprep.subr.mxu0 %v494
    %672 = vmatpush1.msra.mxu0 %v493
    %673 = vmatprep.subr.mxu0 %v488
    %674 = vmatpush1.msra.mxu0 %v487
    %675 = vmatprep.subr.mxu0 %v482
    %676 = vmatpush1.msra.mxu0 %v481
    %677 = vmatprep.subr.mxu0 %v476
    %678 = vmatpush1.msra.mxu0 %v475
    %679 = vmatprep.subr.mxu0 0.0
    %680 = vmatpush2.msra.mxu0 0.0
    %681 = vmatprep.subr.mxu0 0.0
    %682 = vmatpush2.msra.mxu0 0.0
    %683 = vmatprep.subr.mxu0 0.0
    %684 = vmatpush2.msra.mxu0 0.0
    %685 = vmatprep.subr.mxu0 0.0
    %686 = vmatpush2.msra.mxu0 0.0
    %687 = vmatprep.subr.mxu0 0.0
    %688 = vmatpush2.msra.mxu0 0.0
    %689 = vmatprep.subr.mxu0 0.0
    %690 = vmatpush2.msra.mxu0 0.0
    %691 = vmatprep.subr.mxu0 0.0
    %692 = vmatpush2.msra.mxu0 0.0
    %693 = vmatprep.subr.mxu0 0.0
    %694 = vmatpush2.msra.mxu0 0.0
    %695 = vmatprep.subr.mxu0 0.0
    %696 = vmatpush2.msra.mxu0 0.0
    %697 = vmatprep.subr.mxu0 0.0
    %698 = vmatpush2.msra.mxu0 0.0
    %699 = vmatprep.subr.mxu0 0.0
    %700 = vmatpush2.msra.mxu0 0.0
    %701 = vmatprep.subr.mxu0 0.0
    %702 = vmatpush2.msra.mxu0 0.0
    %703 = vmatprep.subr.mxu0 0.0
    %704 = vmatpush2.msra.mxu0 0.0
    %705 = vmatprep.subr.mxu0 0.0
    %706 = vmatpush2.msra.mxu0 0.0
    %707 = vmatprep.subr.mxu0 0.0
    %708 = vmatpush2.msra.mxu0 0.0
    %709 = vmatprep.subr.mxu0 0.0
    %710 = vmatpush2.msra.mxu0 0.0
    %711 = vmatprep.mubr.f32.mxu0 0.0
    %712 = vmatmul.mubr.f32.gmra.mxu0 %v503
    %v713 = vpop.f32.mrf.mxu0
    %v714 = vadd.f32 0.0, %v713
    %v715 = vpop.f32.mrf.mxu0
    %v716 = vadd.f32 0.0, %v715
    %717 = vdwg.mxu0
    %v718 = vld [vmem:[%s2] sm:$0x3f]
    %v720 = vlaneseq
    %v721 = vshrl.u32 %v720, 7
    %v722 = vsub.s32 0, %v721
    %v723 = vrot.slane %v718, %v722
    %v724 = vlaneseq
    %v725 = vshrl.u32 %v724, 7
    %v726 = vsub.s32 1, %v725
    %v727 = vrot.slane %v718, %v726
    %v728 = vlaneseq
    %v729 = vshrl.u32 %v728, 7
    %v730 = vsub.s32 2, %v729
    %v731 = vrot.slane %v718, %v730
    %v732 = vlaneseq
    %v733 = vshrl.u32 %v732, 7
    %v734 = vsub.s32 3, %v733
    %v735 = vrot.slane %v718, %v734
    %v736 = vlaneseq
    %v737 = vshrl.u32 %v736, 7
    %v738 = vsub.s32 4, %v737
    %v739 = vrot.slane %v718, %v738
    %v740 = vlaneseq
    %v741 = vshrl.u32 %v740, 7
    %v742 = vsub.s32 5, %v741
    %v743 = vrot.slane %v718, %v742
    %v750 = vmul.f32 %v572, %v723
    %v751 = vmul.f32 %v574, %v727
    %v752 = vmul.f32 %v643, %v731
    %v753 = vmul.f32 %v645, %v735
    %v754 = vmul.f32 %v714, %v739
    %v755 = vmul.f32 %v716, %v743
    %v756 = vadd.f32 %v750, %v751
    %v757 = vadd.f32 %v756, %v752
    %v758 = vadd.f32 %v757, %v753
    %v759 = vadd.f32 %v758, %v754
    %v760 = vadd.f32 %v759, %v755
    %761 = vadd.xlane.f32.xlu0 %v760
    %v762 = vpop.xlane.xlu0 %761
    %v763 = vmul.f32 %v762, 0.001953125
    %v764 = vmul.f32 %v750, %v572
    %v765 = vmul.f32 %v751, %v574
    %v766 = vmul.f32 %v752, %v643
    %v767 = vmul.f32 %v753, %v645
    %v768 = vmul.f32 %v754, %v714
    %v769 = vmul.f32 %v755, %v716
    %v770 = vadd.f32 %v764, %v765
    %v771 = vadd.f32 %v770, %v766
    %v772 = vadd.f32 %v771, %v767
    %v773 = vadd.f32 %v772, %v768
    %v774 = vadd.f32 %v773, %v769
    %775 = vadd.xlane.f32.xlu0 %v774
    %v776 = vpop.xlane.xlu0 %775
    %v777 = vmul.f32 %v776, 0.001953125
    %v778 = vmul.f32 %v763, %v763
    %v779 = vsub.f32 %v777, %v778
    %v780 = vadd.f32 %v779, 1e-05
    %v781 = vrsqrt.pop %v780
    %v782 = vld [vmem:[%s4] sm:$0xff]
    %v783 = vmul.f32 %v781, %v782
    %v784 = vld [vmem:[%s5] sm:$0xff]
    %v785 = vmul.f32 %v763, %v783
    %v786 = vsub.f32 %v784, %v785
    %788 = vset.pattern.permute.xlu0 0
    %789 = vperm.xlu0 %788, %v783
    %v790 = vpop.permute.xlu0 %789
    %v792 = vmul.f32 %v572, %v790
    %v793 = vmul.f32 %v574, %v790
    %v794 = vmul.f32 %v643, %v790
    %v795 = vmul.f32 %v645, %v790
    %v796 = vmul.f32 %v714, %v790
    %v797 = vmul.f32 %v716, %v790
    %799 = vset.pattern.permute.xlu0 0
    %800 = vperm.xlu0 %799, %v786
    %v801 = vpop.permute.xlu0 %800
    %v803 = vadd.f32 %v792, %v801
    %v804 = vadd.f32 %v793, %v801
    %v805 = vadd.f32 %v794, %v801
    %v806 = vadd.f32 %v795, %v801
    %v807 = vadd.f32 %v796, %v801
    %v808 = vadd.f32 %v797, %v801
    %v809 = vmax.f32 %v803, 0.0
    %v810 = vmax.f32 %v804, 0.0
    %v811 = vmax.f32 %v805, 0.0
    %v812 = vmax.f32 %v806, 0.0
    %v813 = vmax.f32 %v807, 0.0
    %v814 = vmax.f32 %v808, 0.0
    %815 = vst [vmem:[#allocation6] sm:$0xff] %v809
    %816 = vst [vmem:[#allocation6 + $0x8] sm:$0xff] %v810
    %817 = vst [vmem:[#allocation6 + $0x10] sm:$0xff] %v811
    %s818 = scalar_lea.vmem [#allocation6], 24
    %819 = vst [vmem:[%s818] sm:$0xff] %v812
    %820 = vst [vmem:[%s818 + $0x8] sm:$0xff] %v813
    %821 = vst [vmem:[%s818 + $0x10] sm:$0xff] %v814
    // Predicated region
    $region30: #{tpu_custom_call.1} parent=1 // pred_check
      _
    $region31: #{tpu_custom_call.1} parent=1 // pred_check_branch
      %823 = sbr.rel (0) target = $region33
    $region32: #{tpu_custom_call.1} parent=1 // pred_region
      %s825 = ssub.s32 768, 768
      %826 = vsyncadd [#allocation5], %s825
      %s827 = sshll.u32 [#allocation6], 4
      %s828 = int_to_ptr.vmem [resolvable:$true] %s827
      %833 = dma.vmem_to_hbm [thread:$0]  %s828, 768, %s6, [#allocation5], 384, 384, 24
    $region33: #{tpu_custom_call.1} parent=1 // pred_fallthru
      _
    // Predicated region
    $region34: #{tpu_custom_call.1} parent=1 // pred_check
      _
    $region35: #{tpu_custom_call.1} parent=1 // pred_check_branch
      %835 = sbr.rel (0) target = $region37
    $region36: #{tpu_custom_call.1} parent=1 // pred_region
      %836 = dma.done [#allocation5], 768
    $region37: #{tpu_custom_call.1} parent=1 // pred_fallthru
      _
    %837 = vsyncpa [#allocation4], 1
    %838 = vsyncpa [#allocation5], 1

</llo_original>
